<compile_context>
chip_gen: v7x
topology: tpu7x:2x2x1
jax: 0.10.0
libtpu: 0.0.40
codegen_flags: <defaults>
</compile_context>

<pallas_src>
import functools

import jax
import jax.numpy as jnp
from jax import lax
from jax.experimental import pallas as pl
from jax.experimental.pallas import tpu as pltpu


# ----------------------------------------------------------------------------
# Generation-aware hardware queries (trace-time, cached, safe fallbacks).
# ----------------------------------------------------------------------------
@functools.lru_cache(maxsize=None)
def _vmem_budgets():
    """(tile_budget_bytes, vmem_limit_bytes) sized from the actual part.

    v5e/v6e have 128 MiB VMEM per TensorCore, v7x only 64 MiB.  The default
    scoped limit (16/32 MiB) would force needlessly small K tiles, so raise it
    explicitly while keeping headroom for Mosaic's own scratch.
    """
    cap = 64 * 1024 * 1024            # conservative default == v7x per-core VMEM
    try:
        cap = int(pltpu.get_tpu_info().vmem_capacity_bytes)
    except Exception:
        pass
    budget = (cap * 5) // 8           # 40 MiB on v7x, 80 MiB on v5e/v6e
    limit = (cap * 3) // 4            # 48 MiB on v7x, 96 MiB on v5e/v6e
    return budget, limit


@functools.lru_cache(maxsize=None)
def _cores_per_chip():
    """TensorCores sharing one chip: 2 on megacore parts (v4/v5p/v7x), else 1."""
    try:
        kind = jax.devices()[0].device_kind.lower()
    except Exception:
        return 1
    return 2 if any(tag in kind for tag in ("v4", "v5p", "v7")) else 1


# ----------------------------------------------------------------------------
# Tiling plan.
# ----------------------------------------------------------------------------
def _round_up(v, mult):
    return ((v + mult - 1) // mult) * mult


def _sublanes(itemsize):
    # Packed sub-32-bit dtypes tile 16 (bf16) / 32 (int8, fp8) rows per vreg.
    return max(8, 32 // max(int(itemsize), 1))


def _plan_k(bn, m, k, x_itemsize, y_itemsize, budget, max_tk):
    """Pick the K tile.  Returns (tk, grid_k, needs_mask, single_buffered)."""
    x_rows = _round_up(bn, _sublanes(x_itemsize))
    y_rows = _round_up(m, _sublanes(y_itemsize))
    # Hardware-tile-padded footprint of everything resident across the K sweep.
    fixed = (_round_up(bn, 8) * _round_up(m, 128) * 4     # (bn, m) f32 out/acc
             + _round_up(bn, 8) * 128 * 4                 # xs scratch (bn, 1)
             + 8 * _round_up(m, 128) * 4)                 # ys scratch (1, m)
    # Bytes per 128-lane K chunk of the two input tiles (single-buffered).
    per_chunk = x_rows * 128 * x_itemsize + y_rows * 128 * y_itemsize

    # 1) Whole K in one grid step: nothing to pipeline -> single-buffered DMA.
    if (max_tk is None or max_tk >= k) and \
            fixed + per_chunk * pl.cdiv(k, 128) <= budget:
        return k, 1, False, True

    # 2) K-tiled reduction: inputs are double-buffered by the pipeline.
    chunks = max((budget - fixed) // (2 * per_chunk), 1)
    tk_max = int(chunks) * 128
    if max_tk is not None:
        tk_max = min(tk_max, max((int(max_tk) // 128) * 128, 128))
    tk_max = max(tk_max, 128)
    if tk_max >= k:
        return k, 1, False, True
    # Prefer the largest 128-aligned divisor of K (no ragged tail -> no lane
    # masking), as long as it does not shrink the tile by more than 2x.
    c = tk_max // 128
    while c >= 1 and c * 128 * 2 >= tk_max:
        cand = c * 128
        if k % cand == 0:
            return cand, k // cand, False, False
        c -= 1
    return tk_max, pl.cdiv(k, tk_max), True, False


# ----------------------------------------------------------------------------
# Kernel.
# ----------------------------------------------------------------------------
def _dice_kernel(x_ref, y_ref, o_ref, xs_ref, ys_ref, *, k_total, tk, needs_mask):
    kk = pl.program_id(1)
    k_last = pl.num_programs(1) - 1

    @pl.when(kk == 0)
    def _():
        o_ref[...] = jnp.zeros_like(o_ref)
        xs_ref[...] = jnp.zeros_like(xs_ref)
        ys_ref[...] = jnp.zeros_like(ys_ref)

    def _accumulate(x, y):
        # Numerator partial: X @ Y.T accumulated in the resident f32 output.
        o_ref[...] += lax.dot_general(
            x, y, (((1,), (1,)), ((), ())), preferred_element_type=jnp.float32)
        # Row-sum partials. xs stays sublane-major (bn, 1); ys is kept lane-major
        # (1, m) via a ones-row matmul (rides the MXU, no epilogue transpose).
        xs_ref[...] += jnp.sum(x, axis=-1, keepdims=True, dtype=jnp.float32)
        ones_row = jnp.ones((1, y.shape[-1]), dtype=y.dtype)
        ys_ref[...] += lax.dot_general(
            ones_row, y, (((1,), (1,)), ((), ())), preferred_element_type=jnp.float32)

    if needs_mask:
        # Ragged final K tile: zero the out-of-range lanes with a select (not a
        # multiply, so garbage pad lanes cannot propagate NaN/Inf), applied to
        # BOTH operands, and ONLY on the last step.
        @pl.when(kk != k_last)
        def _():
            _accumulate(x_ref[...], y_ref[...])

        @pl.when(kk == k_last)
        def _():
            valid = k_total - kk * tk
            lane = lax.broadcasted_iota(jnp.int32, (1, tk), 1)
            keep = lane < valid
            x = x_ref[...]
            y = y_ref[...]
            _accumulate(jnp.where(keep, x, jnp.zeros_like(x)),
                        jnp.where(keep, y, jnp.zeros_like(y)))
    else:
        _accumulate(x_ref[...], y_ref[...])

    @pl.when(kk == k_last)
    def _():
        numerator = 2.0 * o_ref[...]                       # (bn, m)
        denominator = xs_ref[...] + ys_ref[...]            # (bn,1)+(1,m) -> (bn,m)
        o_ref[...] = 1.0 - (numerator + 1.0) / (denominator + 1.0)


# ----------------------------------------------------------------------------
# pallas_call wrapper.
# ----------------------------------------------------------------------------
def _dice_2d(x, y, max_tk):
    n, k = x.shape
    m, k2 = y.shape
    assert k == k2, "prediction/label must have the same flattened size"

    budget, vmem_limit = _vmem_budgets()

    # Megacore parts (v7x etc.): tile N into two sublane-aligned blocks so the
    # second TensorCore is not idle.  Neutral (grid_n == 1) on 1-core parts.
    grid_n = 2 if (_cores_per_chip() >= 2 and n >= 16 and n % 16 == 0) else 1
    bn = n // grid_n

    tk, grid_k, needs_mask, _single = _plan_k(
        bn, m, k, x.dtype.itemsize, y.dtype.itemsize, budget, max_tk)

    kernel = functools.partial(_dice_kernel, k_total=k, tk=tk, needs_mask=needs_mask)

    # Single-buffer inputs whose block never changes across the grid sweep
    # (nothing to pipeline -> do not waste VMEM on a dead second buffer).
    x_kw = {"pipeline_mode": pl.Buffered(1)} if (grid_k == 1 and grid_n == 1) else {}
    y_kw = {"pipeline_mode": pl.Buffered(1)} if grid_k == 1 else {}

    flops = 2 * n * m * k + 2 * grid_n * m * k + 2 * n * k
    bytes_accessed = (n * k * x.dtype.itemsize
                      + grid_n * m * k * y.dtype.itemsize
                      + n * m * 4)

    return pl.pallas_call(
        kernel,
        out_shape=jax.ShapeDtypeStruct((n, m), jnp.float32),
        grid_spec=pltpu.PrefetchScalarGridSpec(
            num_scalar_prefetch=0,
            grid=(grid_n, grid_k),
            in_specs=[
                pl.BlockSpec((bn, tk), lambda ni, kk: (ni, kk), **x_kw),
                pl.BlockSpec((m, tk), lambda ni, kk: (0, kk), **y_kw),
            ],
            out_specs=pl.BlockSpec((bn, m), lambda ni, kk: (ni, 0)),
            scratch_shapes=[
                pltpu.VMEM((bn, 1), jnp.float32),   # xs: row sums of X block
                pltpu.VMEM((1, m), jnp.float32),    # ys: row sums of Y (lane-major)
            ],
        ),
        compiler_params=pltpu.CompilerParams(
            dimension_semantics=("parallel", "arbitrary"),
            vmem_limit_bytes=int(vmem_limit),
        ),
        cost_estimate=pl.CostEstimate(
            flops=int(flops), transcendentals=0, bytes_accessed=int(bytes_accessed)),
    )(x, y)


@functools.partial(jax.jit, static_argnames=("max_tk",))
def batch_dice_loss(prediction, label, *, max_tk=None):
    """Forward-equivalent to the PyTorch `batch_dice_loss` (no sigmoid applied)."""
    x = prediction.reshape(prediction.shape[0], -1)
    y = label.reshape(label.shape[0], -1)
    n, m = x.shape[0], y.shape[0]

    def _splittable(rows):
        return _cores_per_chip() >= 2 and rows >= 16 and rows % 16 == 0

    # dice(x, y) == dice(y, x).T: put the batch that can be split across
    # TensorCores (and is the larger byte stream) on the tiled grid axis, so the
    # smaller operand is the one re-read per block.  The (m, n) transpose is tiny.
    if _splittable(m) and (m > n or not _splittable(n)):
        return _dice_2d(y, x, max_tk).T
    return _dice_2d(x, y, max_tk)


# ----------------------------------------------------------------------------
# Reference + self-test.
# ----------------------------------------------------------------------------
def _reference(prediction, label):
    x = prediction.reshape(prediction.shape[0], -1).astype(jnp.float32)
    y = label.reshape(label.shape[0], -1).astype(jnp.float32)
    numerator = 2.0 * jnp.einsum("nc,mc->nm", x, y)
    denominator = x.sum(-1)[:, None] + y.sum(-1)[None, :]
    return 1.0 - (numerator + 1.0) / (denominator + 1.0)


if __name__ == "__main__":
    key = jax.random.PRNGKey(0)
    k1, k2, k3, k4 = jax.random.split(key, 4)

    # Small NCHW shapes consistent with a mask-prediction loss.
    prediction = jax.random.uniform(k1, (2, 4, 16, 16), dtype=jnp.float32)
    label = (jax.random.uniform(k2, (2, 4, 16, 16)) > 0.5).astype(jnp.float32)
    ref = _reference(prediction, label)

    # 1) Default path: whole K (=1024) in one grid step, single-buffered inputs.
    out = batch_dice_loss(prediction, label)
    jax.block_until_ready(out)
    assert out.shape == (2, 2)
    assert jnp.allclose(out, ref, atol=1e-5, rtol=1e-5)

    # 2) Forced K tiling: multi-step reduction (128-aligned divisor of K, no mask).
    out2 = batch_dice_loss(prediction, label, max_tk=384)
    jax.block_until_ready(out2)
    assert jnp.allclose(out2, ref, atol=1e-5, rtol=1e-5)

    # 3) Ragged K (=315, not a multiple of 128) + forced tiling: exercises the
    #    last-step-only lane-mask path; also N != M.
    pred3 = jax.random.uniform(k3, (3, 5, 7, 9), dtype=jnp.float32)
    lab3 = (jax.random.uniform(k4, (5, 5, 7, 9)) > 0.5).astype(jnp.float32)
    ref3 = _reference(pred3, lab3)
    out3 = batch_dice_loss(pred3, lab3, max_tk=128)
    jax.block_until_ready(out3)
    assert out3.shape == (3, 5)
    assert jnp.allclose(out3, ref3, atol=1e-4, rtol=1e-4)

    # 4) bf16 inputs (halves HBM bytes; kernel still accumulates in f32 on MXU).
    out_bf = batch_dice_loss(prediction.astype(jnp.bfloat16),
                             label.astype(jnp.bfloat16))
    jax.block_until_ready(out_bf)
    assert jnp.allclose(out_bf, ref, atol=5e-3, rtol=5e-3)

    print("KERNEL_OK")
</pallas_src>

<mosaic_0001>
module attributes {stable_mosaic.version = 11 : i64} {
  func.func @_dice_kernel(%arg0: i32, %arg1: i32, %arg2: memref<2x1024xf32, #tpu.memory_space<vmem>>, %arg3: memref<2x1024xf32, #tpu.memory_space<vmem>>, %arg4: memref<2x2xf32, #tpu.memory_space<vmem>>, %arg5: memref<2x1xf32, #tpu.memory_space<vmem>>, %arg6: memref<1x2xf32, #tpu.memory_space<vmem>>) attributes {dimension_semantics = [#tpu.dimension_semantics<parallel>, #tpu.dimension_semantics<arbitrary>], iteration_bounds = array<i64: 1, 1>, scalar_prefetch = 0 : i64, scratch_operands = 2 : i64, tpu.core_type = #tpu.core_type<tc>, window_params = [{pipeline_mode = #tpu.pipeline_mode<synchronous>, transform_indices = @transform_0, window_bounds = array<i64: 2, 1024>}, {pipeline_mode = #tpu.pipeline_mode<synchronous>, transform_indices = @transform_1, window_bounds = array<i64: 2, 1024>}, {transform_indices = @transform_2, window_bounds = array<i64: 2, 2>}]} {
    %c0_i32 = arith.constant 0 : i32
    %0 = arith.cmpi eq, %arg1, %c0_i32 : i32
    %1 = arith.extui %0 : i1 to i32
    %c0_i32_0 = arith.constant 0 : i32
    %2 = arith.cmpi ne, %1, %c0_i32_0 : i32
    scf.if %2 {
      %cst_21 = arith.constant 0.000000e+00 : f32
      %22 = vector.broadcast %cst_21 : f32 to vector<2x2xf32>
      %c0_22 = arith.constant 0 : index
      %c0_23 = arith.constant 0 : index
      %23 = vector.load %arg4[%c0_22, %c0_23] : memref<2x2xf32, #tpu.memory_space<vmem>>, vector<2x2xf32>
      tpu.vector_store %arg4[%c0_22, %c0_23], %22 {strides = array<i32>} : memref<2x2xf32, #tpu.memory_space<vmem>>, vector<2x2xf32>,
      %cst_24 = arith.constant 0.000000e+00 : f32
      %24 = vector.broadcast %cst_24 : f32 to vector<2x1xf32>
      %c0_25 = arith.constant 0 : index
      %c0_26 = arith.constant 0 : index
      %25 = vector.load %arg5[%c0_25, %c0_26] : memref<2x1xf32, #tpu.memory_space<vmem>>, vector<2x1xf32>
      tpu.vector_store %arg5[%c0_25, %c0_26], %24 {strides = array<i32>} : memref<2x1xf32, #tpu.memory_space<vmem>>, vector<2x1xf32>,
      %cst_27 = arith.constant 0.000000e+00 : f32
      %26 = vector.broadcast %cst_27 : f32 to vector<1x2xf32>
      %c0_28 = arith.constant 0 : index
      %c0_29 = arith.constant 0 : index
      %27 = vector.load %arg6[%c0_28, %c0_29] : memref<1x2xf32, #tpu.memory_space<vmem>>, vector<1x2xf32>
      tpu.vector_store %arg6[%c0_28, %c0_29], %26 {strides = array<i32>} : memref<1x2xf32, #tpu.memory_space<vmem>>, vector<1x2xf32>,
    } else {
    }
    %c0 = arith.constant 0 : index
    %c0_1 = arith.constant 0 : index
    %3 = vector.load %arg2[%c0, %c0_1] : memref<2x1024xf32, #tpu.memory_space<vmem>>, vector<2x1024xf32>
    %c0_2 = arith.constant 0 : index
    %c0_3 = arith.constant 0 : index
    %4 = vector.load %arg3[%c0_2, %c0_3] : memref<2x1024xf32, #tpu.memory_space<vmem>>, vector<2x1024xf32>
    %c0_4 = arith.constant 0 : index
    %c0_5 = arith.constant 0 : index
    %5 = vector.load %arg4[%c0_4, %c0_5] : memref<2x2xf32, #tpu.memory_space<vmem>>, vector<2x2xf32>
    %cst = arith.constant dense<0.000000e+00> : vector<2x2xf32>
    %6 = tpu.matmul %3, %4, %cst {dimension_numbers = #tpu.dot_dimension_numbers<[1], [1], [0], [0], [0, 0, 1, 0], [], []>} : vector<2x1024xf32>, vector<2x1024xf32>, vector<2x2xf32> -> vector<2x2xf32>
    %7 = arith.addf %5, %6 : vector<2x2xf32>
    %c0_6 = arith.constant 0 : index
    %c0_7 = arith.constant 0 : index
    %8 = vector.load %arg4[%c0_6, %c0_7] : memref<2x2xf32, #tpu.memory_space<vmem>>, vector<2x2xf32>
    tpu.vector_store %arg4[%c0_6, %c0_7], %7 {strides = array<i32>} : memref<2x2xf32, #tpu.memory_space<vmem>>, vector<2x2xf32>,
    %c0_8 = arith.constant 0 : index
    %c0_9 = arith.constant 0 : index
    %9 = vector.load %arg5[%c0_8, %c0_9] : memref<2x1xf32, #tpu.memory_space<vmem>>, vector<2x1xf32>
    %cst_10 = arith.constant dense<0.000000e+00> : vector<2xf32>
    %10 = vector.multi_reduction <add>, %3, %cst_10 [1] : vector<2x1024xf32> to vector<2xf32>
    %11 = vector.shape_cast %10 : vector<2xf32> to vector<2x1xf32>
    %12 = arith.addf %9, %11 : vector<2x1xf32>
    %c0_11 = arith.constant 0 : index
    %c0_12 = arith.constant 0 : index
    %13 = vector.load %arg5[%c0_11, %c0_12] : memref<2x1xf32, #tpu.memory_space<vmem>>, vector<2x1xf32>
    tpu.vector_store %arg5[%c0_11, %c0_12], %12 {strides = array<i32>} : memref<2x1xf32, #tpu.memory_space<vmem>>, vector<2x1xf32>,
    %cst_13 = arith.constant 1.000000e+00 : f32
    %14 = vector.broadcast %cst_13 : f32 to vector<1x1024xf32>
    %c0_14 = arith.constant 0 : index
    %c0_15 = arith.constant 0 : index
    %15 = vector.load %arg6[%c0_14, %c0_15] : memref<1x2xf32, #tpu.memory_space<vmem>>, vector<1x2xf32>
    %cst_16 = arith.constant dense<0.000000e+00> : vector<1x2xf32>
    %16 = tpu.matmul %14, %4, %cst_16 {dimension_numbers = #tpu.dot_dimension_numbers<[1], [1], [0], [0], [0, 0, 1, 0], [], []>} : vector<1x1024xf32>, vector<2x1024xf32>, vector<1x2xf32> -> vector<1x2xf32>
    %17 = arith.addf %15, %16 : vector<1x2xf32>
    %c0_17 = arith.constant 0 : index
    %c0_18 = arith.constant 0 : index
    %18 = vector.load %arg6[%c0_17, %c0_18] : memref<1x2xf32, #tpu.memory_space<vmem>>, vector<1x2xf32>
    tpu.vector_store %arg6[%c0_17, %c0_18], %17 {strides = array<i32>} : memref<1x2xf32, #tpu.memory_space<vmem>>, vector<1x2xf32>,
    %c0_i32_19 = arith.constant 0 : i32
    %19 = arith.cmpi eq, %arg1, %c0_i32_19 : i32
    %20 = arith.extui %19 : i1 to i32
    %c0_i32_20 = arith.constant 0 : i32
    %21 = arith.cmpi ne, %20, %c0_i32_20 : i32
    scf.if %21 {
      %c0_21 = arith.constant 0 : index
      %c0_22 = arith.constant 0 : index
      %22 = vector.load %arg4[%c0_21, %c0_22] : memref<2x2xf32, #tpu.memory_space<vmem>>, vector<2x2xf32>
      %cst_23 = arith.constant 2.000000e+00 : f32
      %23 = vector.broadcast %cst_23 : f32 to vector<2x2xf32>
      %24 = arith.mulf %23, %22 : vector<2x2xf32>
      %c0_24 = arith.constant 0 : index
      %c0_25 = arith.constant 0 : index
      %25 = vector.load %arg5[%c0_24, %c0_25] : memref<2x1xf32, #tpu.memory_space<vmem>>, vector<2x1xf32>
      %c0_26 = arith.constant 0 : index
      %c0_27 = arith.constant 0 : index
      %26 = vector.load %arg6[%c0_26, %c0_27] : memref<1x2xf32, #tpu.memory_space<vmem>>, vector<1x2xf32>
      %27 = vector.broadcast %25 : vector<2x1xf32> to vector<2x2xf32>
      %28 = vector.broadcast %26 : vector<1x2xf32> to vector<2x2xf32>
      %29 = arith.addf %27, %28 : vector<2x2xf32>
      %cst_28 = arith.constant 1.000000e+00 : f32
      %30 = vector.broadcast %cst_28 : f32 to vector<2x2xf32>
      %31 = arith.addf %24, %30 : vector<2x2xf32>
      %cst_29 = arith.constant 1.000000e+00 : f32
      %32 = vector.broadcast %cst_29 : f32 to vector<2x2xf32>
      %33 = arith.addf %29, %32 : vector<2x2xf32>
      %34 = arith.divf %31, %33 : vector<2x2xf32>
      %cst_30 = arith.constant 1.000000e+00 : f32
      %35 = vector.broadcast %cst_30 : f32 to vector<2x2xf32>
      %36 = arith.subf %35, %34 : vector<2x2xf32>
      %c0_31 = arith.constant 0 : index
      %c0_32 = arith.constant 0 : index
      %37 = vector.load %arg4[%c0_31, %c0_32] : memref<2x2xf32, #tpu.memory_space<vmem>>, vector<2x2xf32>
      tpu.vector_store %arg4[%c0_31, %c0_32], %36 {strides = array<i32>} : memref<2x2xf32, #tpu.memory_space<vmem>>, vector<2x2xf32>,
    } else {
    }
    return
  }
  func.func @transform_0(%arg0: i32, %arg1: i32) -> (i32, i32) {
    %c0_i32 = arith.constant 0 : i32
    return %arg0, %arg1 : i32, i32
  }
  func.func @transform_1(%arg0: i32, %arg1: i32) -> (i32, i32) {
    %c0_i32 = arith.constant 0 : i32
    %c0_i32_0 = arith.constant 0 : i32
    return %c0_i32, %arg1 : i32, i32
  }
  func.func @transform_2(%arg0: i32, %arg1: i32) -> (i32, i32) {
    %c0_i32 = arith.constant 0 : i32
    %c0_i32_0 = arith.constant 0 : i32
    return %arg0, %c0_i32 : i32, i32
  }
}

</mosaic_0001>

<llo_original>
// kernel: batch_dice_loss.1
$region0: #{batch_dice_loss.1}
  #allocation0 [shape = 'u32[]', space=smem, size = 0x4, offset = 0x4, fixed_abs, tag = 'smem constant byte address 0x4 - core index']
  #allocation1 [shape = 'u32[144,128]{1,0:T(1,128)}', space=vmem, size = 0x12000, scoped, tag = 'internal scratch']
  #allocation2 [shape = 'f32[2,1]{1,0:T(2,128)}', space=vmem, size = 0x400, scoped, tag = 'scratch operand']
  #allocation3 [shape = 'f32[1,2]{1,0:T(1,128)}', space=vmem, size = 0x200, scoped, tag = 'scratch operand']
  %s0 = inlined_call_operand.vmem [shape: f32[2,1024], index: 0, kind: input, shape index: {}]
  %s1 = inlined_call_operand.vmem [shape: f32[2,1024], index: 1, kind: input, shape index: {}]
  %s2 = inlined_call_operand.hbm [shape: f32[2,2], index: 2, kind: output, shape index: {}]
  %s3 = sld [smem:[#allocation0]]
  $region26: #{batch_dice_loss.1} parent=0
    _
  %s5 = ssub.s32 1, %s3
  %s6 = scalar_select 0, %s5, %s3
  $region1: #{batch_dice_loss.1} parent=0
    #allocation4 [shape = 'u8[1024]{0}', space=vmem, size = 0x400, scoped, tag = 'output window, operand 0, single buffered']
    #allocation5 [shape = 's32[1]{0}', space=sflag, size = 0x4, scoped, tag = 'scoped memory for batch_dice_loss.1']
    %7 = vsyncpa [#allocation5], 0
    // Predicated region
    $region2: #{batch_dice_loss.1} parent=1 // pred_check
      _
    $region3: #{batch_dice_loss.1} parent=1 // pred_check_branch
      %9 = sbr.rel (0) target = $region5
    $region4: #{batch_dice_loss.1} parent=1 // pred_region
      _
    $region5: #{batch_dice_loss.1} parent=1 // pred_fallthru
      _
    // Predicated region
    $region6: #{batch_dice_loss.1} parent=1 // pred_check
      _
    $region7: #{batch_dice_loss.1} parent=1 // pred_check_branch
      %11 = sbr.rel (0) target = $region9
    $region8: #{batch_dice_loss.1} parent=1 // pred_region
      _
    $region9: #{batch_dice_loss.1} parent=1 // pred_fallthru
      _
    %p12 = scmp.eq.s32.totalorder 0, 0
    // Predicated region
    $region10: #{batch_dice_loss.1} parent=1 // pred_check
      %p13 = pneg %p12
    $region11: #{batch_dice_loss.1} parent=1 // pred_check_branch
      %15 = sbr.rel (%p13) target = $region13
    $region12: #{batch_dice_loss.1} parent=1 // pred_region
      %vm16 = vcmask 9216
      %17 = vst.msk [vmem:[#allocation4] sm:$0x3] %vm16, 0.0
      %vm18 = vcmask 1024
      %19 = vst.msk [vmem:[#allocation2] sm:$0x3] %vm18, 0.0
      %vm20 = vcmask 8192
      %21 = vst.msk [vmem:[#allocation3] sm:$0x1] %vm20, 0.0
    $region13: #{batch_dice_loss.1} parent=1 // pred_fallthru
      _
    %v22 = vld [vmem:[%s0] sm:$0xff]
    %v23 = vld [vmem:[%s0 + $0x8] sm:$0xff]
    %v24 = vld [vmem:[%s1] sm:$0xff]
    %v25 = vld [vmem:[%s1 + $0x8] sm:$0xff]
    %v26 = vld [vmem:[#allocation4] sm:$0x3]
    %v29 = vcombine.high %v22, %v22
    %v31 = vunpack.c.l.s4 1983009808
    %v32 = vunpack.c.0.s8 %v31
    %v33 = vlaneseq
    %v34 = vshrl.u32 %v33, 7
    %v35 = vsub.s32 %v32, %v34
    %v36 = vrot.slane %v22, %v35
    %v38 = vunpack.c.l.s4 1983009808
    %v39 = vunpack.c.0.s8 %v38
    %v40 = vlaneseq
    %v41 = vshrl.u32 %v40, 7
    %v42 = vsub.s32 %v39, %v41
    %v43 = vrot.slane %v29, %v42
    %v44 = vcombine.high %v36, %v36
    %v45 = vcombine.high %v43, %v43
    %v46 = vcombine.high %v23, %v23
    %v48 = vunpack.c.l.s4 1983009808
    %v49 = vunpack.c.0.s8 %v48
    %v50 = vlaneseq
    %v51 = vshrl.u32 %v50, 7
    %v52 = vsub.s32 %v49, %v51
    %v53 = vrot.slane %v23, %v52
    %v55 = vunpack.c.l.s4 1983009808
    %v56 = vunpack.c.0.s8 %v55
    %v57 = vlaneseq
    %v58 = vshrl.u32 %v57, 7
    %v59 = vsub.s32 %v56, %v58
    %v60 = vrot.slane %v46, %v59
    %v61 = vcombine.high %v53, %v53
    %v62 = vcombine.high %v60, %v60
    %v73 = vcombine.high %v24, %v24
    %v75 = vunpack.c.l.s4 1983009808
    %v76 = vunpack.c.0.s8 %v75
    %v77 = vlaneseq
    %v78 = vshrl.u32 %v77, 7
    %v79 = vsub.s32 %v76, %v78
    %v80 = vrot.slane %v24, %v79
    %v82 = vunpack.c.l.s4 1983009808
    %v83 = vunpack.c.0.s8 %v82
    %v84 = vlaneseq
    %v85 = vshrl.u32 %v84, 7
    %v86 = vsub.s32 %v83, %v85
    %v87 = vrot.slane %v73, %v86
    %v88 = vcombine.high %v80, %v80
    %v89 = vcombine.high %v87, %v87
    %v90 = vcombine.high %v25, %v25
    %v92 = vunpack.c.l.s4 1983009808
    %v93 = vunpack.c.0.s8 %v92
    %v94 = vlaneseq
    %v95 = vshrl.u32 %v94, 7
    %v96 = vsub.s32 %v93, %v95
    %v97 = vrot.slane %v25, %v96
    %v99 = vunpack.c.l.s4 1983009808
    %v100 = vunpack.c.0.s8 %v99
    %v101 = vlaneseq
    %v102 = vshrl.u32 %v101, 7
    %v103 = vsub.s32 %v100, %v102
    %v104 = vrot.slane %v90, %v103
    %v105 = vcombine.high %v97, %v97
    %v106 = vcombine.high %v104, %v104
    %115 = vmatprep.subr.mxu0 %v88
    %116 = vmatpush1.xpose.msra.mxu0 %v80
    %117 = vmatprep.subr.mxu0 0.0
    %118 = vmatpush1.xpose.msra.mxu0 0.0
    %119 = vmatprep.subr.mxu0 0.0
    %120 = vmatpush1.xpose.msra.mxu0 0.0
    %121 = vmatprep.subr.mxu0 0.0
    %122 = vmatpush1.xpose.msra.mxu0 0.0
    %123 = vmatprep.subr.mxu0 0.0
    %124 = vmatpush1.xpose.msra.mxu0 0.0
    %125 = vmatprep.subr.mxu0 0.0
    %126 = vmatpush1.xpose.msra.mxu0 0.0
    %127 = vmatprep.subr.mxu0 0.0
    %128 = vmatpush1.xpose.msra.mxu0 0.0
    %129 = vmatprep.subr.mxu0 0.0
    %130 = vmatpush1.xpose.msra.mxu0 0.0
    %131 = vmatprep.subr.mxu0 0.0
    %132 = vmatpush1.xpose.msra.mxu0 0.0
    %133 = vmatprep.subr.mxu0 0.0
    %134 = vmatpush1.xpose.msra.mxu0 0.0
    %135 = vmatprep.subr.mxu0 0.0
    %136 = vmatpush1.xpose.msra.mxu0 0.0
    %137 = vmatprep.subr.mxu0 0.0
    %138 = vmatpush1.xpose.msra.mxu0 0.0
    %139 = vmatprep.subr.mxu0 0.0
    %140 = vmatpush1.xpose.msra.mxu0 0.0
    %141 = vmatprep.subr.mxu0 0.0
    %142 = vmatpush1.xpose.msra.mxu0 0.0
    %143 = vmatprep.subr.mxu0 0.0
    %144 = vmatpush1.xpose.msra.mxu0 0.0
    %145 = vmatprep.subr.mxu0 0.0
    %146 = vmatpush1.xpose.msra.mxu0 0.0
    %147 = vmatprep.subr.mxu0 0.0
    %148 = vmatpush1.xpose.msra.mxu0 0.0
    %149 = vmatprep.subr.mxu0 0.0
    %150 = vmatpush1.xpose.msra.mxu0 0.0
    %151 = vmatprep.subr.mxu0 0.0
    %152 = vmatpush1.xpose.msra.mxu0 0.0
    %153 = vmatprep.subr.mxu0 0.0
    %154 = vmatpush1.xpose.msra.mxu0 0.0
    %155 = vmatprep.subr.mxu0 0.0
    %156 = vmatpush1.xpose.msra.mxu0 0.0
    %157 = vmatprep.subr.mxu0 0.0
    %158 = vmatpush1.xpose.msra.mxu0 0.0
    %159 = vmatprep.subr.mxu0 0.0
    %160 = vmatpush1.xpose.msra.mxu0 0.0
    %161 = vmatprep.subr.mxu0 0.0
    %162 = vmatpush1.xpose.msra.mxu0 0.0
    %163 = vmatprep.subr.mxu0 0.0
    %164 = vmatpush1.xpose.msra.mxu0 0.0
    %165 = vmatprep.subr.mxu0 0.0
    %166 = vmatpush1.xpose.msra.mxu0 0.0
    %167 = vmatprep.subr.mxu0 0.0
    %168 = vmatpush1.xpose.msra.mxu0 0.0
    %169 = vmatprep.subr.mxu0 0.0
    %170 = vmatpush1.xpose.msra.mxu0 0.0
    %171 = vmatprep.subr.mxu0 0.0
    %172 = vmatpush1.xpose.msra.mxu0 0.0
    %173 = vmatprep.subr.mxu0 0.0
    %174 = vmatpush1.xpose.msra.mxu0 0.0
    %175 = vmatprep.subr.mxu0 0.0
    %176 = vmatpush1.xpose.msra.mxu0 0.0
    %177 = vmatprep.subr.mxu0 0.0
    %178 = vmatpush1.xpose.msra.mxu0 0.0
    %179 = vmatprep.mubr.f32.mxu0 %v44
    %180 = vmatmul.mubr.f32.gmra.mrb[0].mxu0 %v36
    %v181 = vpop.f32.mrb[0].mxu0
    %v182 = vadd.f32 0.0, %v181
    %v183 = vpop.f32.mrb[0].mxu0
    %184 = vdwg.mxu0
    %185 = vmatprep.subr.mxu0 %v89
    %186 = vmatpush1.xpose.msra.mxu0 %v87
    %187 = vmatprep.subr.mxu0 0.0
    %188 = vmatpush1.xpose.msra.mxu0 0.0
    %189 = vmatprep.subr.mxu0 0.0
    %190 = vmatpush1.xpose.msra.mxu0 0.0
    %191 = vmatprep.subr.mxu0 0.0
    %192 = vmatpush1.xpose.msra.mxu0 0.0
    %193 = vmatprep.subr.mxu0 0.0
    %194 = vmatpush1.xpose.msra.mxu0 0.0
    %195 = vmatprep.subr.mxu0 0.0
    %196 = vmatpush1.xpose.msra.mxu0 0.0
    %197 = vmatprep.subr.mxu0 0.0
    %198 = vmatpush1.xpose.msra.mxu0 0.0
    %199 = vmatprep.subr.mxu0 0.0
    %200 = vmatpush1.xpose.msra.mxu0 0.0
    %201 = vmatprep.subr.mxu0 0.0
    %202 = vmatpush1.xpose.msra.mxu0 0.0
    %203 = vmatprep.subr.mxu0 0.0
    %204 = vmatpush1.xpose.msra.mxu0 0.0
    %205 = vmatprep.subr.mxu0 0.0
    %206 = vmatpush1.xpose.msra.mxu0 0.0
    %207 = vmatprep.subr.mxu0 0.0
    %208 = vmatpush1.xpose.msra.mxu0 0.0
    %209 = vmatprep.subr.mxu0 0.0
    %210 = vmatpush1.xpose.msra.mxu0 0.0
    %211 = vmatprep.subr.mxu0 0.0
    %212 = vmatpush1.xpose.msra.mxu0 0.0
    %213 = vmatprep.subr.mxu0 0.0
    %214 = vmatpush1.xpose.msra.mxu0 0.0
    %215 = vmatprep.subr.mxu0 0.0
    %216 = vmatpush1.xpose.msra.mxu0 0.0
    %217 = vmatprep.subr.mxu0 0.0
    %218 = vmatpush1.xpose.msra.mxu0 0.0
    %219 = vmatprep.subr.mxu0 0.0
    %220 = vmatpush1.xpose.msra.mxu0 0.0
    %221 = vmatprep.subr.mxu0 0.0
    %222 = vmatpush1.xpose.msra.mxu0 0.0
    %223 = vmatprep.subr.mxu0 0.0
    %224 = vmatpush1.xpose.msra.mxu0 0.0
    %225 = vmatprep.subr.mxu0 0.0
    %226 = vmatpush1.xpose.msra.mxu0 0.0
    %227 = vmatprep.subr.mxu0 0.0
    %228 = vmatpush1.xpose.msra.mxu0 0.0
    %229 = vmatprep.subr.mxu0 0.0
    %230 = vmatpush1.xpose.msra.mxu0 0.0
    %231 = vmatprep.subr.mxu0 0.0
    %232 = vmatpush1.xpose.msra.mxu0 0.0
    %233 = vmatprep.subr.mxu0 0.0
    %234 = vmatpush1.xpose.msra.mxu0 0.0
    %235 = vmatprep.subr.mxu0 0.0
    %236 = vmatpush1.xpose.msra.mxu0 0.0
    %237 = vmatprep.subr.mxu0 0.0
    %238 = vmatpush1.xpose.msra.mxu0 0.0
    %239 = vmatprep.subr.mxu0 0.0
    %240 = vmatpush1.xpose.msra.mxu0 0.0
    %241 = vmatprep.subr.mxu0 0.0
    %242 = vmatpush1.xpose.msra.mxu0 0.0
    %243 = vmatprep.subr.mxu0 0.0
    %244 = vmatpush1.xpose.msra.mxu0 0.0
    %245 = vmatprep.subr.mxu0 0.0
    %246 = vmatpush1.xpose.msra.mxu0 0.0
    %247 = vmatprep.subr.mxu0 0.0
    %248 = vmatpush1.xpose.msra.mxu0 0.0
    %249 = vmatprep.mubr.f32.mxu0 %v45
    %250 = vmatmul.mubr.f32.gmra.mrb[0].mxu0 %v43
    %v251 = vpop.f32.mrb[0].mxu0
    %v252 = vadd.f32 %v182, %v251
    %v253 = vpop.f32.mrb[0].mxu0
    %254 = vdwg.mxu0
    %255 = vmatprep.subr.mxu0 %v105
    %256 = vmatpush1.xpose.msra.mxu0 %v97
    %257 = vmatprep.subr.mxu0 0.0
    %258 = vmatpush1.xpose.msra.mxu0 0.0
    %259 = vmatprep.subr.mxu0 0.0
    %260 = vmatpush1.xpose.msra.mxu0 0.0
    %261 = vmatprep.subr.mxu0 0.0
    %262 = vmatpush1.xpose.msra.mxu0 0.0
    %263 = vmatprep.subr.mxu0 0.0
    %264 = vmatpush1.xpose.msra.mxu0 0.0
    %265 = vmatprep.subr.mxu0 0.0
    %266 = vmatpush1.xpose.msra.mxu0 0.0
    %267 = vmatprep.subr.mxu0 0.0
    %268 = vmatpush1.xpose.msra.mxu0 0.0
    %269 = vmatprep.subr.mxu0 0.0
    %270 = vmatpush1.xpose.msra.mxu0 0.0
    %271 = vmatprep.subr.mxu0 0.0
    %272 = vmatpush1.xpose.msra.mxu0 0.0
    %273 = vmatprep.subr.mxu0 0.0
    %274 = vmatpush1.xpose.msra.mxu0 0.0
    %275 = vmatprep.subr.mxu0 0.0
    %276 = vmatpush1.xpose.msra.mxu0 0.0
    %277 = vmatprep.subr.mxu0 0.0
    %278 = vmatpush1.xpose.msra.mxu0 0.0
    %279 = vmatprep.subr.mxu0 0.0
    %280 = vmatpush1.xpose.msra.mxu0 0.0
    %281 = vmatprep.subr.mxu0 0.0
    %282 = vmatpush1.xpose.msra.mxu0 0.0
    %283 = vmatprep.subr.mxu0 0.0
    %284 = vmatpush1.xpose.msra.mxu0 0.0
    %285 = vmatprep.subr.mxu0 0.0
    %286 = vmatpush1.xpose.msra.mxu0 0.0
    %287 = vmatprep.subr.mxu0 0.0
    %288 = vmatpush1.xpose.msra.mxu0 0.0
    %289 = vmatprep.subr.mxu0 0.0
    %290 = vmatpush1.xpose.msra.mxu0 0.0
    %291 = vmatprep.subr.mxu0 0.0
    %292 = vmatpush1.xpose.msra.mxu0 0.0
    %293 = vmatprep.subr.mxu0 0.0
    %294 = vmatpush1.xpose.msra.mxu0 0.0
    %295 = vmatprep.subr.mxu0 0.0
    %296 = vmatpush1.xpose.msra.mxu0 0.0
    %297 = vmatprep.subr.mxu0 0.0
    %298 = vmatpush1.xpose.msra.mxu0 0.0
    %299 = vmatprep.subr.mxu0 0.0
    %300 = vmatpush1.xpose.msra.mxu0 0.0
    %301 = vmatprep.subr.mxu0 0.0
    %302 = vmatpush1.xpose.msra.mxu0 0.0
    %303 = vmatprep.subr.mxu0 0.0
    %304 = vmatpush1.xpose.msra.mxu0 0.0
    %305 = vmatprep.subr.mxu0 0.0
    %306 = vmatpush1.xpose.msra.mxu0 0.0
    %307 = vmatprep.subr.mxu0 0.0
    %308 = vmatpush1.xpose.msra.mxu0 0.0
    %309 = vmatprep.subr.mxu0 0.0
    %310 = vmatpush1.xpose.msra.mxu0 0.0
    %311 = vmatprep.subr.mxu0 0.0
    %312 = vmatpush1.xpose.msra.mxu0 0.0
    %313 = vmatprep.subr.mxu0 0.0
    %314 = vmatpush1.xpose.msra.mxu0 0.0
    %315 = vmatprep.subr.mxu0 0.0
    %316 = vmatpush1.xpose.msra.mxu0 0.0
    %317 = vmatprep.subr.mxu0 0.0
    %318 = vmatpush1.xpose.msra.mxu0 0.0
    %319 = vmatprep.mubr.f32.mxu0 %v61
    %320 = vmatmul.mubr.f32.gmra.mrb[0].mxu0 %v53
    %v321 = vpop.f32.mrb[0].mxu0
    %v322 = vadd.f32 %v252, %v321
    %v323 = vpop.f32.mrb[0].mxu0
    %324 = vdwg.mxu0
    %325 = vmatprep.subr.mxu0 %v106
    %326 = vmatpush1.xpose.msra.mxu0 %v104
    %327 = vmatprep.subr.mxu0 0.0
    %328 = vmatpush1.xpose.msra.mxu0 0.0
    %329 = vmatprep.subr.mxu0 0.0
    %330 = vmatpush1.xpose.msra.mxu0 0.0
    %331 = vmatprep.subr.mxu0 0.0
    %332 = vmatpush1.xpose.msra.mxu0 0.0
    %333 = vmatprep.subr.mxu0 0.0
    %334 = vmatpush1.xpose.msra.mxu0 0.0
    %335 = vmatprep.subr.mxu0 0.0
    %336 = vmatpush1.xpose.msra.mxu0 0.0
    %337 = vmatprep.subr.mxu0 0.0
    %338 = vmatpush1.xpose.msra.mxu0 0.0
    %339 = vmatprep.subr.mxu0 0.0
    %340 = vmatpush1.xpose.msra.mxu0 0.0
    %341 = vmatprep.subr.mxu0 0.0
    %342 = vmatpush1.xpose.msra.mxu0 0.0
    %343 = vmatprep.subr.mxu0 0.0
    %344 = vmatpush1.xpose.msra.mxu0 0.0
    %345 = vmatprep.subr.mxu0 0.0
    %346 = vmatpush1.xpose.msra.mxu0 0.0
    %347 = vmatprep.subr.mxu0 0.0
    %348 = vmatpush1.xpose.msra.mxu0 0.0
    %349 = vmatprep.subr.mxu0 0.0
    %350 = vmatpush1.xpose.msra.mxu0 0.0
    %351 = vmatprep.subr.mxu0 0.0
    %352 = vmatpush1.xpose.msra.mxu0 0.0
    %353 = vmatprep.subr.mxu0 0.0
    %354 = vmatpush1.xpose.msra.mxu0 0.0
    %355 = vmatprep.subr.mxu0 0.0
    %356 = vmatpush1.xpose.msra.mxu0 0.0
    %357 = vmatprep.subr.mxu0 0.0
    %358 = vmatpush1.xpose.msra.mxu0 0.0
    %359 = vmatprep.subr.mxu0 0.0
    %360 = vmatpush1.xpose.msra.mxu0 0.0
    %361 = vmatprep.subr.mxu0 0.0
    %362 = vmatpush1.xpose.msra.mxu0 0.0
    %363 = vmatprep.subr.mxu0 0.0
    %364 = vmatpush1.xpose.msra.mxu0 0.0
    %365 = vmatprep.subr.mxu0 0.0
    %366 = vmatpush1.xpose.msra.mxu0 0.0
    %367 = vmatprep.subr.mxu0 0.0
    %368 = vmatpush1.xpose.msra.mxu0 0.0
    %369 = vmatprep.subr.mxu0 0.0
    %370 = vmatpush1.xpose.msra.mxu0 0.0
    %371 = vmatprep.subr.mxu0 0.0
    %372 = vmatpush1.xpose.msra.mxu0 0.0
    %373 = vmatprep.subr.mxu0 0.0
    %374 = vmatpush1.xpose.msra.mxu0 0.0
    %375 = vmatprep.subr.mxu0 0.0
    %376 = vmatpush1.xpose.msra.mxu0 0.0
    %377 = vmatprep.subr.mxu0 0.0
    %378 = vmatpush1.xpose.msra.mxu0 0.0
    %379 = vmatprep.subr.mxu0 0.0
    %380 = vmatpush1.xpose.msra.mxu0 0.0
    %381 = vmatprep.subr.mxu0 0.0
    %382 = vmatpush1.xpose.msra.mxu0 0.0
    %383 = vmatprep.subr.mxu0 0.0
    %384 = vmatpush1.xpose.msra.mxu0 0.0
    %385 = vmatprep.subr.mxu0 0.0
    %386 = vmatpush1.xpose.msra.mxu0 0.0
    %387 = vmatprep.subr.mxu0 0.0
    %388 = vmatpush1.xpose.msra.mxu0 0.0
    %389 = vmatprep.mubr.f32.mxu0 %v62
    %390 = vmatmul.mubr.f32.gmra.mrb[0].mxu0 %v60
    %v391 = vpop.f32.mrb[0].mxu0
    %v392 = vadd.f32 %v322, %v391
    %v393 = vpop.f32.mrb[0].mxu0
    %394 = vdwg.mxu0
    %v395 = vadd.f32 %v26, %v392
    %vm396 = vcmask 9216
    %397 = vst.msk [vmem:[#allocation4] sm:$0x3] %vm396, %v395
    %v398 = vld [vmem:[#allocation2] sm:$0x3]
    %vm399 = vcmask 1041408
    %v400 = vsel %vm399, %v36, 0.0
    %v401 = vsel %vm399, %v44, 0.0
    %v402 = vadd.f32 %v400, %v401
    %v403 = vsel %vm399, %v43, 0.0
    %v404 = vadd.f32 %v402, %v403
    %v405 = vsel %vm399, %v45, 0.0
    %v406 = vadd.f32 %v404, %v405
    %v407 = vsel %vm399, %v53, 0.0
    %v408 = vadd.f32 %v406, %v407
    %v409 = vsel %vm399, %v61, 0.0
    %v410 = vadd.f32 %v408, %v409
    %v411 = vsel %vm399, %v60, 0.0
    %v412 = vadd.f32 %v410, %v411
    %v413 = vsel %vm399, %v62, 0.0
    %v414 = vadd.f32 %v412, %v413
    %415 = vadd.xlane.f32.xlu0 %v414
    %v416 = vpop.xlane.xlu0 %415
    %v417 = vadd.f32 %v398, %v416
    %vm418 = vcmask 1024
    %419 = vst.msk [vmem:[#allocation2] sm:$0x3] %vm418, %v417
    %v420 = vld [vmem:[#allocation3] sm:$0x1]
    %421 = vmatprep.subr.mxu0 %v88
    %422 = vmatpush1.xpose.msra.mxu0 %v80
    %423 = vmatprep.subr.mxu0 0.0
    %424 = vmatpush1.xpose.msra.mxu0 0.0
    %425 = vmatprep.subr.mxu0 0.0
    %426 = vmatpush1.xpose.msra.mxu0 0.0
    %427 = vmatprep.subr.mxu0 0.0
    %428 = vmatpush1.xpose.msra.mxu0 0.0
    %429 = vmatprep.subr.mxu0 0.0
    %430 = vmatpush1.xpose.msra.mxu0 0.0
    %431 = vmatprep.subr.mxu0 0.0
    %432 = vmatpush1.xpose.msra.mxu0 0.0
    %433 = vmatprep.subr.mxu0 0.0
    %434 = vmatpush1.xpose.msra.mxu0 0.0
    %435 = vmatprep.subr.mxu0 0.0
    %436 = vmatpush1.xpose.msra.mxu0 0.0
    %437 = vmatprep.subr.mxu0 0.0
    %438 = vmatpush1.xpose.msra.mxu0 0.0
    %439 = vmatprep.subr.mxu0 0.0
    %440 = vmatpush1.xpose.msra.mxu0 0.0
    %441 = vmatprep.subr.mxu0 0.0
    %442 = vmatpush1.xpose.msra.mxu0 0.0
    %443 = vmatprep.subr.mxu0 0.0
    %444 = vmatpush1.xpose.msra.mxu0 0.0
    %445 = vmatprep.subr.mxu0 0.0
    %446 = vmatpush1.xpose.msra.mxu0 0.0
    %447 = vmatprep.subr.mxu0 0.0
    %448 = vmatpush1.xpose.msra.mxu0 0.0
    %449 = vmatprep.subr.mxu0 0.0
    %450 = vmatpush1.xpose.msra.mxu0 0.0
    %451 = vmatprep.subr.mxu0 0.0
    %452 = vmatpush1.xpose.msra.mxu0 0.0
    %453 = vmatprep.subr.mxu0 0.0
    %454 = vmatpush1.xpose.msra.mxu0 0.0
    %455 = vmatprep.subr.mxu0 0.0
    %456 = vmatpush1.xpose.msra.mxu0 0.0
    %457 = vmatprep.subr.mxu0 0.0
    %458 = vmatpush1.xpose.msra.mxu0 0.0
    %459 = vmatprep.subr.mxu0 0.0
    %460 = vmatpush1.xpose.msra.mxu0 0.0
    %461 = vmatprep.subr.mxu0 0.0
    %462 = vmatpush1.xpose.msra.mxu0 0.0
    %463 = vmatprep.subr.mxu0 0.0
    %464 = vmatpush1.xpose.msra.mxu0 0.0
    %465 = vmatprep.subr.mxu0 0.0
    %466 = vmatpush1.xpose.msra.mxu0 0.0
    %467 = vmatprep.subr.mxu0 0.0
    %468 = vmatpush1.xpose.msra.mxu0 0.0
    %469 = vmatprep.subr.mxu0 0.0
    %470 = vmatpush1.xpose.msra.mxu0 0.0
    %471 = vmatprep.subr.mxu0 0.0
    %472 = vmatpush1.xpose.msra.mxu0 0.0
    %473 = vmatprep.subr.mxu0 0.0
    %474 = vmatpush1.xpose.msra.mxu0 0.0
    %475 = vmatprep.subr.mxu0 0.0
    %476 = vmatpush1.xpose.msra.mxu0 0.0
    %477 = vmatprep.subr.mxu0 0.0
    %478 = vmatpush1.xpose.msra.mxu0 0.0
    %479 = vmatprep.subr.mxu0 0.0
    %480 = vmatpush1.xpose.msra.mxu0 0.0
    %481 = vmatprep.subr.mxu0 0.0
    %482 = vmatpush1.xpose.msra.mxu0 0.0
    %483 = vmatprep.subr.mxu0 0.0
    %484 = vmatpush1.xpose.msra.mxu0 0.0
    %485 = vmatprep.mubr.f32.mxu0 1.0
    %486 = vmatmul.mubr.f32.gmra.mrb[0].mxu0 1.0
    %v487 = vpop.f32.mrb[0].mxu0
    %v488 = vadd.f32 0.0, %v487
    %v489 = vpop.f32.mrb[0].mxu0
    %490 = vdwg.mxu0
    %491 = vmatprep.subr.mxu0 %v89
    %492 = vmatpush1.xpose.msra.mxu0 %v87
    %493 = vmatprep.subr.mxu0 0.0
    %494 = vmatpush1.xpose.msra.mxu0 0.0
    %495 = vmatprep.subr.mxu0 0.0
    %496 = vmatpush1.xpose.msra.mxu0 0.0
    %497 = vmatprep.subr.mxu0 0.0
    %498 = vmatpush1.xpose.msra.mxu0 0.0
    %499 = vmatprep.subr.mxu0 0.0
    %500 = vmatpush1.xpose.msra.mxu0 0.0
    %501 = vmatprep.subr.mxu0 0.0
    %502 = vmatpush1.xpose.msra.mxu0 0.0
    %503 = vmatprep.subr.mxu0 0.0
    %504 = vmatpush1.xpose.msra.mxu0 0.0
    %505 = vmatprep.subr.mxu0 0.0
    %506 = vmatpush1.xpose.msra.mxu0 0.0
    %507 = vmatprep.subr.mxu0 0.0
    %508 = vmatpush1.xpose.msra.mxu0 0.0
    %509 = vmatprep.subr.mxu0 0.0
    %510 = vmatpush1.xpose.msra.mxu0 0.0
    %511 = vmatprep.subr.mxu0 0.0
    %512 = vmatpush1.xpose.msra.mxu0 0.0
    %513 = vmatprep.subr.mxu0 0.0
    %514 = vmatpush1.xpose.msra.mxu0 0.0
    %515 = vmatprep.subr.mxu0 0.0
    %516 = vmatpush1.xpose.msra.mxu0 0.0
    %517 = vmatprep.subr.mxu0 0.0
    %518 = vmatpush1.xpose.msra.mxu0 0.0
    %519 = vmatprep.subr.mxu0 0.0
    %520 = vmatpush1.xpose.msra.mxu0 0.0
    %521 = vmatprep.subr.mxu0 0.0
    %522 = vmatpush1.xpose.msra.mxu0 0.0
    %523 = vmatprep.subr.mxu0 0.0
    %524 = vmatpush1.xpose.msra.mxu0 0.0
    %525 = vmatprep.subr.mxu0 0.0
    %526 = vmatpush1.xpose.msra.mxu0 0.0
    %527 = vmatprep.subr.mxu0 0.0
    %528 = vmatpush1.xpose.msra.mxu0 0.0
    %529 = vmatprep.subr.mxu0 0.0
    %530 = vmatpush1.xpose.msra.mxu0 0.0
    %531 = vmatprep.subr.mxu0 0.0
    %532 = vmatpush1.xpose.msra.mxu0 0.0
    %533 = vmatprep.subr.mxu0 0.0
    %534 = vmatpush1.xpose.msra.mxu0 0.0
    %535 = vmatprep.subr.mxu0 0.0
    %536 = vmatpush1.xpose.msra.mxu0 0.0
    %537 = vmatprep.subr.mxu0 0.0
    %538 = vmatpush1.xpose.msra.mxu0 0.0
    %539 = vmatprep.subr.mxu0 0.0
    %540 = vmatpush1.xpose.msra.mxu0 0.0
    %541 = vmatprep.subr.mxu0 0.0
    %542 = vmatpush1.xpose.msra.mxu0 0.0
    %543 = vmatprep.subr.mxu0 0.0
    %544 = vmatpush1.xpose.msra.mxu0 0.0
    %545 = vmatprep.subr.mxu0 0.0
    %546 = vmatpush1.xpose.msra.mxu0 0.0
    %547 = vmatprep.subr.mxu0 0.0
    %548 = vmatpush1.xpose.msra.mxu0 0.0
    %549 = vmatprep.subr.mxu0 0.0
    %550 = vmatpush1.xpose.msra.mxu0 0.0
    %551 = vmatprep.subr.mxu0 0.0
    %552 = vmatpush1.xpose.msra.mxu0 0.0
    %553 = vmatprep.subr.mxu0 0.0
    %554 = vmatpush1.xpose.msra.mxu0 0.0
    %555 = vmatprep.mubr.f32.mxu0 1.0
    %556 = vmatmul.mubr.f32.gmra.mrb[0].mxu0 1.0
    %v557 = vpop.f32.mrb[0].mxu0
    %v558 = vadd.f32 %v488, %v557
    %v559 = vpop.f32.mrb[0].mxu0
    %560 = vdwg.mxu0
    %561 = vmatprep.subr.mxu0 %v105
    %562 = vmatpush1.xpose.msra.mxu0 %v97
    %563 = vmatprep.subr.mxu0 0.0
    %564 = vmatpush1.xpose.msra.mxu0 0.0
    %565 = vmatprep.subr.mxu0 0.0
    %566 = vmatpush1.xpose.msra.mxu0 0.0
    %567 = vmatprep.subr.mxu0 0.0
    %568 = vmatpush1.xpose.msra.mxu0 0.0
    %569 = vmatprep.subr.mxu0 0.0
    %570 = vmatpush1.xpose.msra.mxu0 0.0
    %571 = vmatprep.subr.mxu0 0.0
    %572 = vmatpush1.xpose.msra.mxu0 0.0
    %573 = vmatprep.subr.mxu0 0.0
    %574 = vmatpush1.xpose.msra.mxu0 0.0
    %575 = vmatprep.subr.mxu0 0.0
    %576 = vmatpush1.xpose.msra.mxu0 0.0
    %577 = vmatprep.subr.mxu0 0.0
    %578 = vmatpush1.xpose.msra.mxu0 0.0
    %579 = vmatprep.subr.mxu0 0.0
    %580 = vmatpush1.xpose.msra.mxu0 0.0
    %581 = vmatprep.subr.mxu0 0.0
    %582 = vmatpush1.xpose.msra.mxu0 0.0
    %583 = vmatprep.subr.mxu0 0.0
    %584 = vmatpush1.xpose.msra.mxu0 0.0
    %585 = vmatprep.subr.mxu0 0.0
    %586 = vmatpush1.xpose.msra.mxu0 0.0
    %587 = vmatprep.subr.mxu0 0.0
    %588 = vmatpush1.xpose.msra.mxu0 0.0
    %589 = vmatprep.subr.mxu0 0.0
    %590 = vmatpush1.xpose.msra.mxu0 0.0
    %591 = vmatprep.subr.mxu0 0.0
    %592 = vmatpush1.xpose.msra.mxu0 0.0
    %593 = vmatprep.subr.mxu0 0.0
    %594 = vmatpush1.xpose.msra.mxu0 0.0
    %595 = vmatprep.subr.mxu0 0.0
    %596 = vmatpush1.xpose.msra.mxu0 0.0
    %597 = vmatprep.subr.mxu0 0.0
    %598 = vmatpush1.xpose.msra.mxu0 0.0
    %599 = vmatprep.subr.mxu0 0.0
    %600 = vmatpush1.xpose.msra.mxu0 0.0
    %601 = vmatprep.subr.mxu0 0.0
    %602 = vmatpush1.xpose.msra.mxu0 0.0
    %603 = vmatprep.subr.mxu0 0.0
    %604 = vmatpush1.xpose.msra.mxu0 0.0
    %605 = vmatprep.subr.mxu0 0.0
    %606 = vmatpush1.xpose.msra.mxu0 0.0
    %607 = vmatprep.subr.mxu0 0.0
    %608 = vmatpush1.xpose.msra.mxu0 0.0
    %609 = vmatprep.subr.mxu0 0.0
    %610 = vmatpush1.xpose.msra.mxu0 0.0
    %611 = vmatprep.subr.mxu0 0.0
    %612 = vmatpush1.xpose.msra.mxu0 0.0
    %613 = vmatprep.subr.mxu0 0.0
    %614 = vmatpush1.xpose.msra.mxu0 0.0
    %615 = vmatprep.subr.mxu0 0.0
    %616 = vmatpush1.xpose.msra.mxu0 0.0
    %617 = vmatprep.subr.mxu0 0.0
    %618 = vmatpush1.xpose.msra.mxu0 0.0
    %619 = vmatprep.subr.mxu0 0.0
    %620 = vmatpush1.xpose.msra.mxu0 0.0
    %621 = vmatprep.subr.mxu0 0.0
    %622 = vmatpush1.xpose.msra.mxu0 0.0
    %623 = vmatprep.subr.mxu0 0.0
    %624 = vmatpush1.xpose.msra.mxu0 0.0
    %625 = vmatprep.mubr.f32.mxu0 1.0
    %626 = vmatmul.mubr.f32.gmra.mrb[0].mxu0 1.0
    %v627 = vpop.f32.mrb[0].mxu0
    %v628 = vadd.f32 %v558, %v627
    %v629 = vpop.f32.mrb[0].mxu0
    %630 = vdwg.mxu0
    %631 = vmatprep.subr.mxu0 %v106
    %632 = vmatpush1.xpose.msra.mxu0 %v104
    %633 = vmatprep.subr.mxu0 0.0
    %634 = vmatpush1.xpose.msra.mxu0 0.0
    %635 = vmatprep.subr.mxu0 0.0
    %636 = vmatpush1.xpose.msra.mxu0 0.0
    %637 = vmatprep.subr.mxu0 0.0
    %638 = vmatpush1.xpose.msra.mxu0 0.0
    %639 = vmatprep.subr.mxu0 0.0
    %640 = vmatpush1.xpose.msra.mxu0 0.0
    %641 = vmatprep.subr.mxu0 0.0
    %642 = vmatpush1.xpose.msra.mxu0 0.0
    %643 = vmatprep.subr.mxu0 0.0
    %644 = vmatpush1.xpose.msra.mxu0 0.0
    %645 = vmatprep.subr.mxu0 0.0
    %646 = vmatpush1.xpose.msra.mxu0 0.0
    %647 = vmatprep.subr.mxu0 0.0
    %648 = vmatpush1.xpose.msra.mxu0 0.0
    %649 = vmatprep.subr.mxu0 0.0
    %650 = vmatpush1.xpose.msra.mxu0 0.0
    %651 = vmatprep.subr.mxu0 0.0
    %652 = vmatpush1.xpose.msra.mxu0 0.0
    %653 = vmatprep.subr.mxu0 0.0
    %654 = vmatpush1.xpose.msra.mxu0 0.0
    %655 = vmatprep.subr.mxu0 0.0
    %656 = vmatpush1.xpose.msra.mxu0 0.0
    %657 = vmatprep.subr.mxu0 0.0
    %658 = vmatpush1.xpose.msra.mxu0 0.0
    %659 = vmatprep.subr.mxu0 0.0
    %660 = vmatpush1.xpose.msra.mxu0 0.0
    %661 = vmatprep.subr.mxu0 0.0
    %662 = vmatpush1.xpose.msra.mxu0 0.0
    %663 = vmatprep.subr.mxu0 0.0
    %664 = vmatpush1.xpose.msra.mxu0 0.0
    %665 = vmatprep.subr.mxu0 0.0
    %666 = vmatpush1.xpose.msra.mxu0 0.0
    %667 = vmatprep.subr.mxu0 0.0
    %668 = vmatpush1.xpose.msra.mxu0 0.0
    %669 = vmatprep.subr.mxu0 0.0
    %670 = vmatpush1.xpose.msra.mxu0 0.0
    %671 = vmatprep.subr.mxu0 0.0
    %672 = vmatpush1.xpose.msra.mxu0 0.0
    %673 = vmatprep.subr.mxu0 0.0
    %674 = vmatpush1.xpose.msra.mxu0 0.0
    %675 = vmatprep.subr.mxu0 0.0
    %676 = vmatpush1.xpose.msra.mxu0 0.0
    %677 = vmatprep.subr.mxu0 0.0
    %678 = vmatpush1.xpose.msra.mxu0 0.0
    %679 = vmatprep.subr.mxu0 0.0
    %680 = vmatpush1.xpose.msra.mxu0 0.0
    %681 = vmatprep.subr.mxu0 0.0
    %682 = vmatpush1.xpose.msra.mxu0 0.0
    %683 = vmatprep.subr.mxu0 0.0
    %684 = vmatpush1.xpose.msra.mxu0 0.0
    %685 = vmatprep.subr.mxu0 0.0
    %686 = vmatpush1.xpose.msra.mxu0 0.0
    %687 = vmatprep.subr.mxu0 0.0
    %688 = vmatpush1.xpose.msra.mxu0 0.0
    %689 = vmatprep.subr.mxu0 0.0
    %690 = vmatpush1.xpose.msra.mxu0 0.0
    %691 = vmatprep.subr.mxu0 0.0
    %692 = vmatpush1.xpose.msra.mxu0 0.0
    %693 = vmatprep.subr.mxu0 0.0
    %694 = vmatpush1.xpose.msra.mxu0 0.0
    %695 = vmatprep.mubr.f32.mxu0 1.0
    %696 = vmatmul.mubr.f32.gmra.mrb[0].mxu0 1.0
    %v697 = vpop.f32.mrb[0].mxu0
    %v698 = vadd.f32 %v628, %v697
    %v699 = vpop.f32.mrb[0].mxu0
    %700 = vdwg.mxu0
    %v701 = vadd.f32 %v420, %v698
    %vm702 = vcmask 8192
    %703 = vst.msk [vmem:[#allocation3] sm:$0x1] %vm702, %v701
    // Predicated region
    $region14: #{batch_dice_loss.1} parent=1 // pred_check
      %p704 = pneg %p12
    $region15: #{batch_dice_loss.1} parent=1 // pred_check_branch
      %706 = sbr.rel (%p704) target = $region17
    $region16: #{batch_dice_loss.1} parent=1 // pred_region
      %v707 = vld [vmem:[#allocation4] sm:$0x3]
      %v708 = vmul.f32 %v707, 2.0
      %v709 = vld [vmem:[#allocation2] sm:$0x3]
      %v710 = vld [vmem:[#allocation3] sm:$0x1]
      %712 = vset.pattern.permute.xlu0 0
      %713 = vperm.xlu0 %712, %v709
      %v714 = vpop.permute.xlu0 %713
      %v717 = vlaneseq
      %v718 = vshrl.u32 %v717, 7
      %v719 = vsub.s32 0, %v718
      %v720 = vrot.slane %v710, %v719
      %v722 = vadd.f32 %v714, %v720
      %v723 = vadd.f32 %v708, 1.0
      %v724 = vadd.f32 %v722, 1.0
      %v725 = vrcp.pop %v724
      %v726 = vmul.f32 %v723, %v725
      %v727 = vsub.f32 1.0, %v726
      %728 = vst.msk [vmem:[#allocation4] sm:$0x3] %vm396, %v727
    $region17: #{batch_dice_loss.1} parent=1 // pred_fallthru
      _
    // Predicated region
    $region18: #{batch_dice_loss.1} parent=1 // pred_check
      _
    $region19: #{batch_dice_loss.1} parent=1 // pred_check_branch
      %730 = sbr.rel (0) target = $region21
    $region20: #{batch_dice_loss.1} parent=1 // pred_region
      %s732 = ssub.s32 32, 32
      %733 = vsyncadd [#allocation5], %s732
      %s735 = sshll.u32 [#allocation4], 4
      %s736 = int_to_ptr.vmem [resolvable:$true] %s735
      %738 = dma.vmem_to_hbm [thread:$0]  %s736, 32, %s2, [#allocation5]
    $region21: #{batch_dice_loss.1} parent=1 // pred_fallthru
      _
    // Predicated region
    $region22: #{batch_dice_loss.1} parent=1 // pred_check
      _
    $region23: #{batch_dice_loss.1} parent=1 // pred_check_branch
      %740 = sbr.rel (0) target = $region25
    $region24: #{batch_dice_loss.1} parent=1 // pred_region
      %741 = dma.done [#allocation5], 32
    $region25: #{batch_dice_loss.1} parent=1 // pred_fallthru
      _
    %742 = vsyncpa [#allocation5], 1

</llo_original>
